<compile_context>
chip_gen: v5e
topology: v5e:2x2
jax: 0.10.0
libtpu: 0.0.40
codegen_flags: <defaults>
</compile_context>

<pallas_src>
import functools

import jax
import jax.numpy as jnp
from jax.experimental import pallas as pl
from jax.experimental.pallas import tpu as pltpu

LN_EPS = 1e-12
NEG_INF = float(jnp.finfo(jnp.float32).min)


def _choose_seq_tile(S):
    """Largest sequence tile that divides S and keeps blocks (8,128)-legal."""
    if S <= 512:
        return S                      # full extent -> always legal
    for ts in (512, 256, 128, 64, 32, 16, 8):
        if S % ts == 0:
            return ts
    return S


def _choose_chunk(TS):
    """Gather chunk size (rows per DMA semaphore); must divide TS."""
    for ch in (64, 32, 16, 8):
        if TS % ch == 0:
            return ch
    return TS


def _make_kernel(TS, CH):
    n_chunks = TS // CH

    def kernel(ids_ref,     # SMEM  (B, S) int32   (scalar prefetch, pre-clamped)
               wemb_hbm,    # HBM   (V, H)         (pl.ANY, manual row DMAs)
               pt_ref,      # VMEM  (TS, H) f32    pos[:S] + type[0] tile
               gamma_ref,   # VMEM  (1, H)  f32
               beta_ref,    # VMEM  (1, H)  f32
               hid_ref,     # VMEM  (TS, H)        output block (batch squeezed)
               gathered,    # VMEM  scratch (TS, H), word_emb dtype
               sems):       # DMA semaphores (n_chunks,)
        st = pl.program_id(0)
        b = pl.program_id(1)
        base = st * TS

        def issue_chunk(c):
            # Fully unrolled at trace time: CH back-to-back descriptor pushes,
            # all on this chunk's semaphore.
            for i in range(CH):
                r = c * CH + i
                tok = ids_ref[b, base + r]
                pltpu.make_async_copy(
                    wemb_hbm.at[pl.ds(tok, 1), :],
                    gathered.at[pl.ds(r, 1), :],
                    sems.at[c],
                ).start()

        def wait_chunk(c):
            # Aggregate wait: one (CH, H) descriptor's byte count equals the sum
            # of the CH issued (1, H) row copies on sems[c].
            pltpu.make_async_copy(
                wemb_hbm.at[pl.ds(0, CH), :],
                gathered.at[pl.ds(0, CH), :],
                sems.at[c],
            ).wait()

        gamma = gamma_ref[...]
        beta = beta_ref[...]

        # Prologue: keep up to two chunks of row-gather DMAs in flight.
        issue_chunk(0)
        if n_chunks > 1:
            issue_chunk(1)

        for c in range(n_chunks):
            wait_chunk(c)
            if c + 2 < n_chunks:
                issue_chunk(c + 2)          # overlaps the compute below

            lo = c * CH
            x = (gathered[pl.ds(lo, CH), :].astype(jnp.float32)
                 + pt_ref[pl.ds(lo, CH), :])

            # LayerNorm (f32, two-pass variance, gamma folded into the scale).
            mean = jnp.mean(x, axis=-1, keepdims=True)
            xc = x - mean
            var = jnp.mean(xc * xc, axis=-1, keepdims=True)
            scale = gamma * jax.lax.rsqrt(var + LN_EPS)
            hid_ref[pl.ds(lo, CH), :] = (xc * scale + beta).astype(hid_ref.dtype)

    return kernel


@functools.partial(jax.jit, static_argnames=("out_dtype",))
def bert_embeddings(input_ids, attention_mask, params, *, out_dtype=jnp.float32):
    B, S = input_ids.shape
    word_emb = params["word_emb"]
    V, H = word_emb.shape

    # Clamp ids in the wrapper: no OOB HBM row DMA possible inside the kernel.
    ids = jnp.clip(input_ids.astype(jnp.int32), 0, V - 1)

    # Batch-invariant pieces combined once in XLA (default HF path:
    # token_type_ids == 0, position_ids == arange(S)).
    pos_type = (params["pos_emb"][:S]
                + params["type_emb"][0][None, :]).astype(jnp.float32)
    gamma = params["ln_gamma"].reshape(1, H).astype(jnp.float32)
    beta = params["ln_beta"].reshape(1, H).astype(jnp.float32)

    TS = _choose_seq_tile(S)
    CH = _choose_chunk(TS)
    n_st = S // TS
    n_chunks = TS // CH

    grid_spec = pltpu.PrefetchScalarGridSpec(
        num_scalar_prefetch=1,                      # input_ids -> SMEM
        grid=(n_st, B),                             # batch innermost: pos_type
                                                    # block index constant -> no re-DMA
        in_specs=[
            pl.BlockSpec(memory_space=pl.ANY),                   # word table in HBM
            pl.BlockSpec((TS, H), lambda st, b, ids: (st, 0)),   # pos+type tile
            pl.BlockSpec((1, H), lambda st, b, ids: (0, 0)),     # gamma
            pl.BlockSpec((1, H), lambda st, b, ids: (0, 0)),     # beta
        ],
        out_specs=pl.BlockSpec((None, TS, H), lambda st, b, ids: (b, st, 0)),
        scratch_shapes=[
            pltpu.VMEM((TS, H), word_emb.dtype),    # gathered word rows
            pltpu.SemaphoreType.DMA((n_chunks,)),   # one sem per gather chunk
        ],
    )

    # Explicit VMEM budget (double-buffered pos+type and output tiles, gather
    # scratch, gamma/beta) with headroom; capped to fit v7x's 64 MiB per TC.
    we_bytes = jnp.dtype(word_emb.dtype).itemsize
    out_bytes = jnp.dtype(out_dtype).itemsize
    vmem = 2 * TS * H * 4              # pos+type (double buffered)
    vmem += 2 * TS * H * out_bytes     # output tile (double buffered)
    vmem += TS * H * we_bytes          # gather scratch
    vmem += 4 * 2 * H * 4              # gamma / beta
    vmem_bytes = int(min(max(2 * vmem + (4 << 20), 16 << 20), 64 << 20))

    hidden = pl.pallas_call(
        _make_kernel(TS, CH),
        grid_spec=grid_spec,
        out_shape=jax.ShapeDtypeStruct((B, S, H), out_dtype),
        compiler_params=pltpu.CompilerParams(
            dimension_semantics=("parallel", "parallel"),
            vmem_limit_bytes=vmem_bytes,
        ),
    )(ids, word_emb, pos_type, gamma, beta)

    # get_extended_attention_mask: trivial elementwise op -> plain XLA.
    m = attention_mask.astype(jnp.float32)
    if m.ndim == 3:
        ext = m[:, None, :, :]
    elif m.ndim == 2:
        ext = m[:, None, None, :]
    else:
        raise ValueError(
            f"Wrong shape for input_ids (shape {input_ids.shape}) or "
            f"attention_mask (shape {attention_mask.shape})")
    ext_mask = (1.0 - ext) * NEG_INF
    return hidden, ext_mask


def reference(input_ids, attention_mask, params):
    B, S = input_ids.shape
    we = params["word_emb"][input_ids]                     # (B, S, H)
    pe = params["pos_emb"][:S][None]                       # (1, S, H)
    te = params["type_emb"][0][None, None]                 # (1, 1, H)
    x = we + pe + te
    mean = x.mean(-1, keepdims=True)
    var = ((x - mean) ** 2).mean(-1, keepdims=True)
    y = (x - mean) / jnp.sqrt(var + LN_EPS)
    y = y * params["ln_gamma"] + params["ln_beta"]
    m = attention_mask.astype(jnp.float32).reshape(B, 1, 1, S)
    ext = (1.0 - m) * NEG_INF
    return y, ext


if __name__ == "__main__":
    B, S, H = 2, 8, 32
    V, P, T = 128, 64, 2      # vocab, max_position_embeddings, type_vocab_size

    key = jax.random.PRNGKey(0)
    k_we, k_pe, k_te, k_g, k_b, k_ids = jax.random.split(key, 6)

    params = {
        "word_emb": 0.02 * jax.random.normal(k_we, (V, H), jnp.float32),
        "pos_emb": 0.02 * jax.random.normal(k_pe, (P, H), jnp.float32),
        "type_emb": 0.02 * jax.random.normal(k_te, (T, H), jnp.float32),
        "ln_gamma": 1.0 + 0.1 * jax.random.normal(k_g, (H,), jnp.float32),
        "ln_beta": 0.1 * jax.random.normal(k_b, (H,), jnp.float32),
    }

    input_ids = jax.random.randint(k_ids, (B, S), 0, V, dtype=jnp.int32)
    attention_mask = jnp.array(
        [[1, 1, 1, 1, 1, 0, 0, 0],
         [1, 1, 1, 1, 1, 1, 1, 0]], dtype=jnp.float32)

    hidden, ext_mask = bert_embeddings(input_ids, attention_mask, params)
    hidden = jax.block_until_ready(hidden)
    ext_mask = jax.block_until_ready(ext_mask)

    ref_hidden, ref_mask = reference(input_ids, attention_mask, params)
    assert hidden.shape == (B, S, H) and ext_mask.shape == (B, 1, 1, S)
    assert jnp.allclose(hidden, ref_hidden, atol=1e-5, rtol=1e-5)
    assert jnp.allclose(ext_mask, ref_mask)

    print("KERNEL_OK")
</pallas_src>

<mosaic_0001>
module attributes {stable_mosaic.version = 11 : i64} {
  func.func @kernel(%arg0: i32, %arg1: i32, %arg2: memref<2x8xi32, #tpu.memory_space<smem>>, %arg3: memref<128x32xf32, #tpu.memory_space<any>>, %arg4: memref<8x32xf32, #tpu.memory_space<vmem>>, %arg5: memref<1x32xf32, #tpu.memory_space<vmem>>, %arg6: memref<1x32xf32, #tpu.memory_space<vmem>>, %arg7: memref<1x8x32xf32, #tpu.memory_space<vmem>>, %arg8: memref<8x32xf32, #tpu.memory_space<vmem>>, %arg9: memref<1x!tpu.dma_semaphore, #tpu.memory_space<semaphore_mem>>) attributes {dimension_semantics = [#tpu.dimension_semantics<parallel>, #tpu.dimension_semantics<parallel>], iteration_bounds = array<i64: 1, 2>, scalar_prefetch = 1 : i64, scratch_operands = 2 : i64, tpu.core_type = #tpu.core_type<tc>, window_params = [{}, {transform_indices = @transform_1, window_bounds = array<i64: 8, 32>}, {pipeline_mode = #tpu.pipeline_mode<synchronous>, transform_indices = @transform_2, window_bounds = array<i64: 1, 32>}, {pipeline_mode = #tpu.pipeline_mode<synchronous>, transform_indices = @transform_3, window_bounds = array<i64: 1, 32>}, {transform_indices = @transform_4, window_bounds = array<i64: 1, 8, 32>}]} {
    %c8_i32 = arith.constant 8 : i32
    %0 = arith.muli %arg0, %c8_i32 : i32
    %c0 = arith.constant 0 : index
    %c0_0 = arith.constant 0 : index
    %1 = vector.load %arg5[%c0, %c0_0] : memref<1x32xf32, #tpu.memory_space<vmem>>, vector<1x32xf32>
    %c0_1 = arith.constant 0 : index
    %c0_2 = arith.constant 0 : index
    %2 = vector.load %arg6[%c0_1, %c0_2] : memref<1x32xf32, #tpu.memory_space<vmem>>, vector<1x32xf32>
    %c0_i32 = arith.constant 0 : i32
    %3 = arith.addi %0, %c0_i32 : i32
    %4 = arith.index_cast %arg1 : i32 to index
    %5 = arith.index_cast %3 : i32 to index
    %6 = memref.load %arg2[%4, %5] : memref<2x8xi32, #tpu.memory_space<smem>>
    %c0_i32_3 = arith.constant 0 : i32
    %c0_i32_4 = arith.constant 0 : i32
    %7 = tpu.memref_slice %arg3[%6, %c0_i32_4] : memref<128x32xf32, #tpu.memory_space<any>> -> memref<1x32xf32, #tpu.memory_space<any>>
    %c0_i32_5 = arith.constant 0 : i32
    %c0_i32_6 = arith.constant 0 : i32
    %8 = tpu.memref_slice %arg8[%c0_i32_5, %c0_i32_6] : memref<8x32xf32, #tpu.memory_space<vmem>> -> memref<1x32xf32, #tpu.memory_space<vmem>>
    %9 = tpu.memref_slice %arg9[%c0_i32_3] : memref<1x!tpu.dma_semaphore, #tpu.memory_space<semaphore_mem>> -> memref<1x!tpu.dma_semaphore, #tpu.memory_space<semaphore_mem>>
    %10 = tpu.memref_squeeze %9 : memref<1x!tpu.dma_semaphore, #tpu.memory_space<semaphore_mem>> -> memref<!tpu.dma_semaphore, #tpu.memory_space<semaphore_mem>>
    tpu.enqueue_dma source(%7 : memref<1x32xf32, #tpu.memory_space<any>>) target(%8 : memref<1x32xf32, #tpu.memory_space<vmem>>) target_semaphore(%10 : memref<!tpu.dma_semaphore, #tpu.memory_space<semaphore_mem>>)
    %c1_i32 = arith.constant 1 : i32
    %11 = arith.addi %0, %c1_i32 : i32
    %12 = arith.index_cast %arg1 : i32 to index
    %13 = arith.index_cast %11 : i32 to index
    %14 = memref.load %arg2[%12, %13] : memref<2x8xi32, #tpu.memory_space<smem>>
    %c0_i32_7 = arith.constant 0 : i32
    %c0_i32_8 = arith.constant 0 : i32
    %15 = tpu.memref_slice %arg3[%14, %c0_i32_8] : memref<128x32xf32, #tpu.memory_space<any>> -> memref<1x32xf32, #tpu.memory_space<any>>
    %c1_i32_9 = arith.constant 1 : i32
    %c0_i32_10 = arith.constant 0 : i32
    %16 = tpu.memref_slice %arg8[%c1_i32_9, %c0_i32_10] : memref<8x32xf32, #tpu.memory_space<vmem>> -> memref<1x32xf32, #tpu.memory_space<vmem>>
    %17 = tpu.memref_slice %arg9[%c0_i32_7] : memref<1x!tpu.dma_semaphore, #tpu.memory_space<semaphore_mem>> -> memref<1x!tpu.dma_semaphore, #tpu.memory_space<semaphore_mem>>
    %18 = tpu.memref_squeeze %17 : memref<1x!tpu.dma_semaphore, #tpu.memory_space<semaphore_mem>> -> memref<!tpu.dma_semaphore, #tpu.memory_space<semaphore_mem>>
    tpu.enqueue_dma source(%15 : memref<1x32xf32, #tpu.memory_space<any>>) target(%16 : memref<1x32xf32, #tpu.memory_space<vmem>>) target_semaphore(%18 : memref<!tpu.dma_semaphore, #tpu.memory_space<semaphore_mem>>)
    %c2_i32 = arith.constant 2 : i32
    %19 = arith.addi %0, %c2_i32 : i32
    %20 = arith.index_cast %arg1 : i32 to index
    %21 = arith.index_cast %19 : i32 to index
    %22 = memref.load %arg2[%20, %21] : memref<2x8xi32, #tpu.memory_space<smem>>
    %c0_i32_11 = arith.constant 0 : i32
    %c0_i32_12 = arith.constant 0 : i32
    %23 = tpu.memref_slice %arg3[%22, %c0_i32_12] : memref<128x32xf32, #tpu.memory_space<any>> -> memref<1x32xf32, #tpu.memory_space<any>>
    %c2_i32_13 = arith.constant 2 : i32
    %c0_i32_14 = arith.constant 0 : i32
    %24 = tpu.memref_slice %arg8[%c2_i32_13, %c0_i32_14] : memref<8x32xf32, #tpu.memory_space<vmem>> -> memref<1x32xf32, #tpu.memory_space<vmem>>
    %25 = tpu.memref_slice %arg9[%c0_i32_11] : memref<1x!tpu.dma_semaphore, #tpu.memory_space<semaphore_mem>> -> memref<1x!tpu.dma_semaphore, #tpu.memory_space<semaphore_mem>>
    %26 = tpu.memref_squeeze %25 : memref<1x!tpu.dma_semaphore, #tpu.memory_space<semaphore_mem>> -> memref<!tpu.dma_semaphore, #tpu.memory_space<semaphore_mem>>
    tpu.enqueue_dma source(%23 : memref<1x32xf32, #tpu.memory_space<any>>) target(%24 : memref<1x32xf32, #tpu.memory_space<vmem>>) target_semaphore(%26 : memref<!tpu.dma_semaphore, #tpu.memory_space<semaphore_mem>>)
    %c3_i32 = arith.constant 3 : i32
    %27 = arith.addi %0, %c3_i32 : i32
    %28 = arith.index_cast %arg1 : i32 to index
    %29 = arith.index_cast %27 : i32 to index
    %30 = memref.load %arg2[%28, %29] : memref<2x8xi32, #tpu.memory_space<smem>>
    %c0_i32_15 = arith.constant 0 : i32
    %c0_i32_16 = arith.constant 0 : i32
    %31 = tpu.memref_slice %arg3[%30, %c0_i32_16] : memref<128x32xf32, #tpu.memory_space<any>> -> memref<1x32xf32, #tpu.memory_space<any>>
    %c3_i32_17 = arith.constant 3 : i32
    %c0_i32_18 = arith.constant 0 : i32
    %32 = tpu.memref_slice %arg8[%c3_i32_17, %c0_i32_18] : memref<8x32xf32, #tpu.memory_space<vmem>> -> memref<1x32xf32, #tpu.memory_space<vmem>>
    %33 = tpu.memref_slice %arg9[%c0_i32_15] : memref<1x!tpu.dma_semaphore, #tpu.memory_space<semaphore_mem>> -> memref<1x!tpu.dma_semaphore, #tpu.memory_space<semaphore_mem>>
    %34 = tpu.memref_squeeze %33 : memref<1x!tpu.dma_semaphore, #tpu.memory_space<semaphore_mem>> -> memref<!tpu.dma_semaphore, #tpu.memory_space<semaphore_mem>>
    tpu.enqueue_dma source(%31 : memref<1x32xf32, #tpu.memory_space<any>>) target(%32 : memref<1x32xf32, #tpu.memory_space<vmem>>) target_semaphore(%34 : memref<!tpu.dma_semaphore, #tpu.memory_space<semaphore_mem>>)
    %c4_i32 = arith.constant 4 : i32
    %35 = arith.addi %0, %c4_i32 : i32
    %36 = arith.index_cast %arg1 : i32 to index
    %37 = arith.index_cast %35 : i32 to index
    %38 = memref.load %arg2[%36, %37] : memref<2x8xi32, #tpu.memory_space<smem>>
    %c0_i32_19 = arith.constant 0 : i32
    %c0_i32_20 = arith.constant 0 : i32
    %39 = tpu.memref_slice %arg3[%38, %c0_i32_20] : memref<128x32xf32, #tpu.memory_space<any>> -> memref<1x32xf32, #tpu.memory_space<any>>
    %c4_i32_21 = arith.constant 4 : i32
    %c0_i32_22 = arith.constant 0 : i32
    %40 = tpu.memref_slice %arg8[%c4_i32_21, %c0_i32_22] : memref<8x32xf32, #tpu.memory_space<vmem>> -> memref<1x32xf32, #tpu.memory_space<vmem>>
    %41 = tpu.memref_slice %arg9[%c0_i32_19] : memref<1x!tpu.dma_semaphore, #tpu.memory_space<semaphore_mem>> -> memref<1x!tpu.dma_semaphore, #tpu.memory_space<semaphore_mem>>
    %42 = tpu.memref_squeeze %41 : memref<1x!tpu.dma_semaphore, #tpu.memory_space<semaphore_mem>> -> memref<!tpu.dma_semaphore, #tpu.memory_space<semaphore_mem>>
    tpu.enqueue_dma source(%39 : memref<1x32xf32, #tpu.memory_space<any>>) target(%40 : memref<1x32xf32, #tpu.memory_space<vmem>>) target_semaphore(%42 : memref<!tpu.dma_semaphore, #tpu.memory_space<semaphore_mem>>)
    %c5_i32 = arith.constant 5 : i32
    %43 = arith.addi %0, %c5_i32 : i32
    %44 = arith.index_cast %arg1 : i32 to index
    %45 = arith.index_cast %43 : i32 to index
    %46 = memref.load %arg2[%44, %45] : memref<2x8xi32, #tpu.memory_space<smem>>
    %c0_i32_23 = arith.constant 0 : i32
    %c0_i32_24 = arith.constant 0 : i32
    %47 = tpu.memref_slice %arg3[%46, %c0_i32_24] : memref<128x32xf32, #tpu.memory_space<any>> -> memref<1x32xf32, #tpu.memory_space<any>>
    %c5_i32_25 = arith.constant 5 : i32
    %c0_i32_26 = arith.constant 0 : i32
    %48 = tpu.memref_slice %arg8[%c5_i32_25, %c0_i32_26] : memref<8x32xf32, #tpu.memory_space<vmem>> -> memref<1x32xf32, #tpu.memory_space<vmem>>
    %49 = tpu.memref_slice %arg9[%c0_i32_23] : memref<1x!tpu.dma_semaphore, #tpu.memory_space<semaphore_mem>> -> memref<1x!tpu.dma_semaphore, #tpu.memory_space<semaphore_mem>>
    %50 = tpu.memref_squeeze %49 : memref<1x!tpu.dma_semaphore, #tpu.memory_space<semaphore_mem>> -> memref<!tpu.dma_semaphore, #tpu.memory_space<semaphore_mem>>
    tpu.enqueue_dma source(%47 : memref<1x32xf32, #tpu.memory_space<any>>) target(%48 : memref<1x32xf32, #tpu.memory_space<vmem>>) target_semaphore(%50 : memref<!tpu.dma_semaphore, #tpu.memory_space<semaphore_mem>>)
    %c6_i32 = arith.constant 6 : i32
    %51 = arith.addi %0, %c6_i32 : i32
    %52 = arith.index_cast %arg1 : i32 to index
    %53 = arith.index_cast %51 : i32 to index
    %54 = memref.load %arg2[%52, %53] : memref<2x8xi32, #tpu.memory_space<smem>>
    %c0_i32_27 = arith.constant 0 : i32
    %c0_i32_28 = arith.constant 0 : i32
    %55 = tpu.memref_slice %arg3[%54, %c0_i32_28] : memref<128x32xf32, #tpu.memory_space<any>> -> memref<1x32xf32, #tpu.memory_space<any>>
    %c6_i32_29 = arith.constant 6 : i32
    %c0_i32_30 = arith.constant 0 : i32
    %56 = tpu.memref_slice %arg8[%c6_i32_29, %c0_i32_30] : memref<8x32xf32, #tpu.memory_space<vmem>> -> memref<1x32xf32, #tpu.memory_space<vmem>>
    %57 = tpu.memref_slice %arg9[%c0_i32_27] : memref<1x!tpu.dma_semaphore, #tpu.memory_space<semaphore_mem>> -> memref<1x!tpu.dma_semaphore, #tpu.memory_space<semaphore_mem>>
    %58 = tpu.memref_squeeze %57 : memref<1x!tpu.dma_semaphore, #tpu.memory_space<semaphore_mem>> -> memref<!tpu.dma_semaphore, #tpu.memory_space<semaphore_mem>>
    tpu.enqueue_dma source(%55 : memref<1x32xf32, #tpu.memory_space<any>>) target(%56 : memref<1x32xf32, #tpu.memory_space<vmem>>) target_semaphore(%58 : memref<!tpu.dma_semaphore, #tpu.memory_space<semaphore_mem>>)
    %c7_i32 = arith.constant 7 : i32
    %59 = arith.addi %0, %c7_i32 : i32
    %60 = arith.index_cast %arg1 : i32 to index
    %61 = arith.index_cast %59 : i32 to index
    %62 = memref.load %arg2[%60, %61] : memref<2x8xi32, #tpu.memory_space<smem>>
    %c0_i32_31 = arith.constant 0 : i32
    %c0_i32_32 = arith.constant 0 : i32
    %63 = tpu.memref_slice %arg3[%62, %c0_i32_32] : memref<128x32xf32, #tpu.memory_space<any>> -> memref<1x32xf32, #tpu.memory_space<any>>
    %c7_i32_33 = arith.constant 7 : i32
    %c0_i32_34 = arith.constant 0 : i32
    %64 = tpu.memref_slice %arg8[%c7_i32_33, %c0_i32_34] : memref<8x32xf32, #tpu.memory_space<vmem>> -> memref<1x32xf32, #tpu.memory_space<vmem>>
    %65 = tpu.memref_slice %arg9[%c0_i32_31] : memref<1x!tpu.dma_semaphore, #tpu.memory_space<semaphore_mem>> -> memref<1x!tpu.dma_semaphore, #tpu.memory_space<semaphore_mem>>
    %66 = tpu.memref_squeeze %65 : memref<1x!tpu.dma_semaphore, #tpu.memory_space<semaphore_mem>> -> memref<!tpu.dma_semaphore, #tpu.memory_space<semaphore_mem>>
    tpu.enqueue_dma source(%63 : memref<1x32xf32, #tpu.memory_space<any>>) target(%64 : memref<1x32xf32, #tpu.memory_space<vmem>>) target_semaphore(%66 : memref<!tpu.dma_semaphore, #tpu.memory_space<semaphore_mem>>)
    %c0_i32_35 = arith.constant 0 : i32
    %c0_i32_36 = arith.constant 0 : i32
    %c0_i32_37 = arith.constant 0 : i32
    %67 = tpu.memref_slice %arg3[%c0_i32_36, %c0_i32_37] : memref<128x32xf32, #tpu.memory_space<any>> -> memref<8x32xf32, #tpu.memory_space<any>>
    %c0_i32_38 = arith.constant 0 : i32
    %c0_i32_39 = arith.constant 0 : i32
    %68 = tpu.memref_slice %arg8[%c0_i32_38, %c0_i32_39] : memref<8x32xf32, #tpu.memory_space<vmem>> -> memref<8x32xf32, #tpu.memory_space<vmem>>
    %69 = tpu.memref_slice %arg9[%c0_i32_35] : memref<1x!tpu.dma_semaphore, #tpu.memory_space<semaphore_mem>> -> memref<1x!tpu.dma_semaphore, #tpu.memory_space<semaphore_mem>>
    %70 = tpu.memref_squeeze %69 : memref<1x!tpu.dma_semaphore, #tpu.memory_space<semaphore_mem>> -> memref<!tpu.dma_semaphore, #tpu.memory_space<semaphore_mem>>
    tpu.wait_dma2 semaphore(%70 : memref<!tpu.dma_semaphore, #tpu.memory_space<semaphore_mem>>) src(%67 : memref<8x32xf32, #tpu.memory_space<any>>) dst(%68 : memref<8x32xf32, #tpu.memory_space<vmem>>)
    %c0_40 = arith.constant 0 : index
    %c0_41 = arith.constant 0 : index
    %71 = vector.load %arg8[%c0_40, %c0_41] : memref<8x32xf32, #tpu.memory_space<vmem>>, vector<8x32xf32>
    %c0_42 = arith.constant 0 : index
    %c0_43 = arith.constant 0 : index
    %72 = vector.load %arg4[%c0_42, %c0_43] : memref<8x32xf32, #tpu.memory_space<vmem>>, vector<8x32xf32>
    %73 = arith.addf %71, %72 : vector<8x32xf32>
    %cst = arith.constant dense<0.000000e+00> : vector<8xf32>
    %74 = vector.multi_reduction <add>, %73, %cst [1] : vector<8x32xf32> to vector<8xf32>
    %75 = vector.shape_cast %74 : vector<8xf32> to vector<8x1xf32>
    %cst_44 = arith.constant 3.200000e+01 : f32
    %76 = vector.broadcast %cst_44 : f32 to vector<8x1xf32>
    %77 = arith.divf %75, %76 : vector<8x1xf32>
    %78 = vector.broadcast %77 : vector<8x1xf32> to vector<8x32xf32>
    %79 = arith.subf %73, %78 : vector<8x32xf32>
    %80 = arith.mulf %79, %79 : vector<8x32xf32>
    %cst_45 = arith.constant dense<0.000000e+00> : vector<8xf32>
    %81 = vector.multi_reduction <add>, %80, %cst_45 [1] : vector<8x32xf32> to vector<8xf32>
    %82 = vector.shape_cast %81 : vector<8xf32> to vector<8x1xf32>
    %cst_46 = arith.constant 3.200000e+01 : f32
    %83 = vector.broadcast %cst_46 : f32 to vector<8x1xf32>
    %84 = arith.divf %82, %83 : vector<8x1xf32>
    %cst_47 = arith.constant 9.99999996E-13 : f32
    %85 = vector.broadcast %cst_47 : f32 to vector<8x1xf32>
    %86 = arith.addf %84, %85 : vector<8x1xf32>
    %87 = math.rsqrt %86 : vector<8x1xf32>
    %88 = vector.broadcast %1 : vector<1x32xf32> to vector<8x32xf32>
    %89 = vector.broadcast %87 : vector<8x1xf32> to vector<8x32xf32>
    %90 = arith.mulf %88, %89 : vector<8x32xf32>
    %91 = arith.mulf %79, %90 : vector<8x32xf32>
    %92 = vector.broadcast %2 : vector<1x32xf32> to vector<8x32xf32>
    %93 = arith.addf %91, %92 : vector<8x32xf32>
    %c0_48 = arith.constant 0 : index
    %c0_49 = arith.constant 0 : index
    %c0_50 = arith.constant 0 : index
    %94 = vector.load %arg7[%c0_48, %c0_49, %c0_50] : memref<1x8x32xf32, #tpu.memory_space<vmem>>, vector<1x8x32xf32>
    %95 = vector.shape_cast %94 : vector<1x8x32xf32> to vector<8x32xf32>
    %96 = vector.shape_cast %93 : vector<8x32xf32> to vector<1x8x32xf32>
    tpu.vector_store %arg7[%c0_48, %c0_49, %c0_50], %96 {strides = array<i32>} : memref<1x8x32xf32, #tpu.memory_space<vmem>>, vector<1x8x32xf32>,
    return
  }
  func.func @transform_1(%arg0: i32, %arg1: i32, %arg2: memref<2x8xi32, #tpu.memory_space<smem>>) -> (i32, i32) {
    %c0_i32 = arith.constant 0 : i32
    %c0_i32_0 = arith.constant 0 : i32
    return %arg0, %c0_i32 : i32, i32
  }
  func.func @transform_2(%arg0: i32, %arg1: i32, %arg2: memref<2x8xi32, #tpu.memory_space<smem>>) -> (i32, i32) {
    %c0_i32 = arith.constant 0 : i32
    %c0_i32_0 = arith.constant 0 : i32
    %c0_i32_1 = arith.constant 0 : i32
    return %c0_i32, %c0_i32_0 : i32, i32
  }
  func.func @transform_3(%arg0: i32, %arg1: i32, %arg2: memref<2x8xi32, #tpu.memory_space<smem>>) -> (i32, i32) {
    %c0_i32 = arith.constant 0 : i32
    %c0_i32_0 = arith.constant 0 : i32
    %c0_i32_1 = arith.constant 0 : i32
    return %c0_i32, %c0_i32_0 : i32, i32
  }
  func.func @transform_4(%arg0: i32, %arg1: i32, %arg2: memref<2x8xi32, #tpu.memory_space<smem>>) -> (i32, i32, i32) {
    %c0_i32 = arith.constant 0 : i32
    %c0_i32_0 = arith.constant 0 : i32
    return %arg1, %arg0, %c0_i32 : i32, i32, i32
  }
}

</mosaic_0001>

<llo_original>
// kernel: bert_embeddings.1
$region0: #{bert_embeddings.1}
  #allocation0 [shape = 'u32[]', space=smem, size = 0x4, offset = 0x4, fixed_abs, tag = 'smem constant byte address 0x4 - core index']
  #allocation1 [shape = 'u32[72,128]{1,0:T(1,128)}', space=vmem, size = 0x9000, scoped, tag = 'internal scratch']
  #allocation2 [shape = 'f32[8,32]{1,0:T(8,128)}', space=vmem, size = 0x1000, scoped, tag = 'scratch operand']
  #allocation3 [shape = 's32[1]{0}', space=sflag, size = 0x4, scoped, tag = 'scratch operand']
  #allocation4 [shape = 's32[1]{0}', space=sflag, size = 0x4, scoped, tag = 'scoped memory for bert_embeddings.1']
  #allocation5 [shape = 'u8[1024]{0}', space=smem, size = 0x400, scoped, tag = 'prefetched SMEM operand 0']
  #allocation8 [shape = 's32[]', space=sflag, size = 0x4, offset = 0, fixed_abs, tag = 'sflag constant byte address 0x0 - dummy sync flag']
  #allocation9 [shape = 's32[]', space=sflag, size = 0x4, offset = 0, fixed_abs, tag = 'sflag constant byte address 0x0 - dummy sync flag']
  #allocation10 [shape = 's32[]', space=sflag, size = 0x4, offset = 0, fixed_abs, tag = 'sflag constant byte address 0x0 - dummy sync flag']
  #allocation11 [shape = 's32[]', space=sflag, size = 0x4, offset = 0, fixed_abs, tag = 'sflag constant byte address 0x0 - dummy sync flag']
  #allocation12 [shape = 's32[]', space=sflag, size = 0x4, offset = 0, fixed_abs, tag = 'sflag constant byte address 0x0 - dummy sync flag']
  #allocation13 [shape = 's32[]', space=sflag, size = 0x4, offset = 0, fixed_abs, tag = 'sflag constant byte address 0x0 - dummy sync flag']
  #allocation14 [shape = 's32[]', space=sflag, size = 0x4, offset = 0, fixed_abs, tag = 'sflag constant byte address 0x0 - dummy sync flag']
  #allocation15 [shape = 's32[]', space=sflag, size = 0x4, offset = 0, fixed_abs, tag = 'sflag constant byte address 0x0 - dummy sync flag']
  %s0 = inlined_call_operand.vmem [shape: s32[2,8], index: 0, kind: input, shape index: {}]
  %s1 = inlined_call_operand.vmem [shape: f32[128,32], index: 1, kind: input, shape index: {}]
  %s2 = inlined_call_operand.vmem [shape: f32[8,32], index: 2, kind: input, shape index: {}]
  %s3 = inlined_call_operand.vmem [shape: f32[1,32], index: 3, kind: input, shape index: {}]
  %s4 = inlined_call_operand.vmem [shape: f32[1,32], index: 4, kind: input, shape index: {}]
  %s5 = inlined_call_operand.hbm [shape: f32[2,8,32], index: 5, kind: output, shape index: {}]
  %s6 = sld [smem:[#allocation0]]
  $region285: #{bert_embeddings.1} parent=0
    _
  %s8 = ssub.s32 1, %s6
  %s9 = scalar_select 0, %s8, %s6
  %s11 = sshll.u32 %s0, 4
  %s12 = int_to_ptr.vmem [resolvable:$true] %s11
  %14 = dma.vmem_to_smem %s12, 32, [#allocation5], [#allocation4]
  %16 = dma.done [#allocation4], 32
  %17 = sfence
  $region1: #{bert_embeddings.1} parent=0
    #allocation6 [shape = 'u8[8192]{0}', space=vmem, size = 0x2000, scoped, tag = 'output window, operand 0']
    #allocation7 [shape = 's32[2]{0}', space=sflag, size = 0x8, scoped, tag = 'scoped memory for bert_embeddings.1']
    %18 = vsyncpa [#allocation7], 0
    %s19 = scalar_lea.sflag [#allocation7], 1
    %20 = vsyncpa %s19, 0
    loop: start=0, step=1, limit=4
    $region2: #{bert_embeddings.1} parent=1 // loop_pre_header
      _
    $region3: #{bert_embeddings.1} parent=1 // loop_header
      %s22 = sphi 0, %s26
      %p23 = scmp.ge.s32.totalorder %s22, 4
      %s29 = sphi 0, %s41
      %s30 = sphi 0, %s37
      %s31 = sphi 0, %s29
      %s32 = sphi 0, %s30
      %s33 = sphi 0, %s31
      %s34 = sphi 0, %s32
      %s44 = sphi 0, %s46
      %s47 = sphi 0, %s44
      %s48 = sphi 0, %s47
      %s64 = sphi 0, %s48
      %s68 = sphi 0, %s68
      %s70 = sphi 0, %s68
      %s71 = sphi 0, %s70
      %s85 = sphi 0, %s71
      %s89 = sphi 0, %s89
      %s91 = sphi 0, %s89
      %s92 = sphi 0, %s91
      %s106 = sphi 0, %s92
      %s114 = sphi 0, %s116
      %s117 = sphi 0, %s114
      %s118 = sphi 0, %s117
      %s134 = sphi 0, %s118
    $region4: #{bert_embeddings.1} parent=1 // loop_header_branch
      %25 = sbr.rel (%p23) target = $region8
    $region5: #{bert_embeddings.1} parent=1 // loop_body
      %s27 = ssub.s32 %s22, 1
      %s28 = ssub.s32 %s22, 2
      %s35 = sadd.s32 1, %s30
      %p36 = scmp.ge.s32.totalorder %s35, 2
      %s37 = scalar_select %p36, 0, %s35
      %s38 = sadd.s32 1, %s29
      %s39 = scalar_select %p36, %s38, %s29
      %p40 = scmp.ge.s32.totalorder %s39, 1
      %s41 = scalar_select %p40, 0, %s39
      %s42 = ssub.s32 %s29, %s41
      %p43 = scmp.eq.s32.totalorder %s42, 0
      %s45 = sadd.s32 %s44, 1
      %s46 = scalar_select %p43, %s44, %s45
      %p49 = pneg %p43
      %p50 = scmp.eq.s32.totalorder %s22, 1
      %p51 = por %p49, %p50
      %p52 = scmp.ne.s32.totalorder %s44, %s47
      %p53 = scmp.eq.s32.totalorder %s22, 0
      %p54 = por %p52, %p53
      %p55 = scmp.ne.s32.totalorder %s44, %s47
      %p56 = scmp.eq.s32.totalorder %s27, 1
      %p57 = por %p55, %p56
      %p58 = scmp.ne.s32.totalorder %s47, %s48
      %p59 = scmp.eq.s32.totalorder %s27, 0
      %p60 = por %p58, %p59
      %p61 = scmp.ne.s32.totalorder %s47, %s48
      %p62 = scmp.eq.s32.totalorder %s28, 1
      %p63 = por %p61, %p62
      %p65 = scmp.ne.s32.totalorder %s48, %s64
      %p66 = scmp.eq.s32.totalorder %s28, 0
      %p67 = por %p65, %p66
      %s69 = sadd.s32 %s68, 1
      %p72 = scmp.eq.s32.totalorder %s22, 1
      %p73 = scmp.ne.s32.totalorder %s68, %s70
      %p74 = scmp.eq.s32.totalorder %s22, 0
      %p75 = por %p73, %p74
      %p76 = scmp.ne.s32.totalorder %s68, %s70
      %p77 = scmp.eq.s32.totalorder %s27, 1
      %p78 = por %p76, %p77
      %p79 = scmp.ne.s32.totalorder %s70, %s71
      %p80 = scmp.eq.s32.totalorder %s27, 0
      %p81 = por %p79, %p80
      %p82 = scmp.ne.s32.totalorder %s70, %s71
      %p83 = scmp.eq.s32.totalorder %s28, 1
      %p84 = por %p82, %p83
      %p86 = scmp.ne.s32.totalorder %s71, %s85
      %p87 = scmp.eq.s32.totalorder %s28, 0
      %p88 = por %p86, %p87
      %s90 = sadd.s32 %s89, 1
      %p93 = scmp.eq.s32.totalorder %s22, 1
      %p94 = scmp.ne.s32.totalorder %s89, %s91
      %p95 = scmp.eq.s32.totalorder %s22, 0
      %p96 = por %p94, %p95
      %p97 = scmp.ne.s32.totalorder %s89, %s91
      %p98 = scmp.eq.s32.totalorder %s27, 1
      %p99 = por %p97, %p98
      %p100 = scmp.ne.s32.totalorder %s91, %s92
      %p101 = scmp.eq.s32.totalorder %s27, 0
      %p102 = por %p100, %p101
      %p103 = scmp.ne.s32.totalorder %s91, %s92
      %p104 = scmp.eq.s32.totalorder %s28, 1
      %p105 = por %p103, %p104
      %p107 = scmp.ne.s32.totalorder %s92, %s106
      %p108 = scmp.eq.s32.totalorder %s28, 0
      %p109 = por %p107, %p108
      %s110 = ssub.s32 %s30, %s37
      %s111 = ssub.s32 %s29, %s41
      %s112 = sor.u32 %s110, %s111
      %p113 = scmp.eq.s32.totalorder %s112, 0
      %s115 = sadd.s32 %s114, 1
      %s116 = scalar_select %p113, %s114, %s115
      %p119 = pneg %p113
      %p120 = scmp.eq.s32.totalorder %s22, 1
      %p121 = por %p119, %p120
      %p122 = scmp.ne.s32.totalorder %s114, %s117
      %p123 = scmp.eq.s32.totalorder %s22, 0
      %p124 = por %p122, %p123
      %p125 = scmp.ne.s32.totalorder %s114, %s117
      %p126 = scmp.eq.s32.totalorder %s27, 1
      %p127 = por %p125, %p126
      %p128 = scmp.ne.s32.totalorder %s117, %s118
      %p129 = scmp.eq.s32.totalorder %s27, 0
      %p130 = por %p128, %p129
      %p131 = scmp.ne.s32.totalorder %s117, %s118
      %p132 = scmp.eq.s32.totalorder %s28, 1
      %p133 = por %p131, %p132
      %p135 = scmp.ne.s32.totalorder %s118, %s134
      %p136 = scmp.eq.s32.totalorder %s28, 0
      %p137 = por %p135, %p136
      %p138 = scmp.le.s32.totalorder 1, %s22
      %p139 = scmp.lt.s32.totalorder %s22, 3
      %p140 = pnand %p138, %p139
      %p141 = pneg %p140
      // Predicated region
      $region9: #{bert_embeddings.1} parent=5 // pred_check
        _
      $region10: #{bert_embeddings.1} parent=5 // pred_check_branch
        %143 = sbr.rel (%p140) target = $region12
      $region11: #{bert_embeddings.1} parent=5 // pred_region
        %s144 = ssub.s32 %s22, 1
        // Predicated region
        $region13: #{bert_embeddings.1} parent=11 // pred_check
          %p145 = pneg %p60
        $region14: #{bert_embeddings.1} parent=11 // pred_check_branch
          %147 = sbr.rel (%p145) target = $region16
        $region15: #{bert_embeddings.1} parent=11 // pred_region
          %p148 = scmp.lt.s32.totalorder %s31, 0
          %s149 = scalar_select %p148, %s31, 0
          %s150 = smul.addr %s149, 8
          %s151 = scalar_lea.vmem %s2, %s150
        $region16: #{bert_embeddings.1} parent=11 // pred_fallthru
          _
        // Predicated region
        $region17: #{bert_embeddings.1} parent=11 // pred_check
          %p152 = pneg %p81
        $region18: #{bert_embeddings.1} parent=11 // pred_check_branch
          %154 = sbr.rel (%p152) target = $region20
        $region19: #{bert_embeddings.1} parent=11 // pred_region
          _
        $region20: #{bert_embeddings.1} parent=11 // pred_fallthru
          _
        // Predicated region
        $region21: #{bert_embeddings.1} parent=11 // pred_check
          %p155 = pneg %p102
        $region22: #{bert_embeddings.1} parent=11 // pred_check_branch
          %157 = sbr.rel (%p155) target = $region24
        $region23: #{bert_embeddings.1} parent=11 // pred_region
          _
        $region24: #{bert_embeddings.1} parent=11 // pred_fallthru
          _
      $region12: #{bert_embeddings.1} parent=5 // pred_fallthru
        _
      %p158 = scmp.lt.s32.totalorder %s22, 2
      // Predicated region
      $region25: #{bert_embeddings.1} parent=5 // pred_check
        %p159 = pneg %p158
      $region26: #{bert_embeddings.1} parent=5 // pred_check_branch
        %161 = sbr.rel (%p159) target = $region28
      $region27: #{bert_embeddings.1} parent=5 // pred_region
        _
      $region28: #{bert_embeddings.1} parent=5 // pred_fallthru
        _
      %p162 = scmp.le.s32.totalorder 1, %s22
      %p163 = scmp.lt.s32.totalorder %s22, 3
      %p164 = pnand %p162, %p163
      %p165 = pneg %p164
      // Predicated region
      $region29: #{bert_embeddings.1} parent=5 // pred_check
        _
      $region30: #{bert_embeddings.1} parent=5 // pred_check_branch
        %167 = sbr.rel (%p164) target = $region32
      $region31: #{bert_embeddings.1} parent=5 // pred_region
        %s168 = ssub.s32 %s22, 1
        %p169 = scmp.lt.s32.totalorder %s31, 0
        %s170 = scalar_select %p169, %s31, 0
        %s171 = smul.addr %s170, 8
        %s172 = scalar_lea.vmem %s2, %s171
        %p173 = pneg %p60
        %p174 = pneg %p57
        %p175 = pneg %p81
        %p176 = pneg %p78
        %p177 = pneg %p102
        %p178 = pneg %p99
        %p179 = pneg %p130
        %p180 = pneg %p127
        %s181 = sand.u32 %s117, 1
        %s182 = scalar_lea.sflag [#allocation7], %s181
        %s183 = sand.u32 %s117, 1
        %s184 = smul.addr %s183, 8
        %s185 = scalar_lea.vmem [#allocation6], %s184
        %p186 = scmp.lt.s32.totalorder %s31, 0
        %s187 = scalar_select %p186, %s31, 0
        %s188 = smul.addr %s187, 8
        %s189 = scalar_lea.vmem %s2, %s188
        %s190 = smul.u32 %s31, 8
        %v191 = vld [vmem:[%s3] sm:$0x1]
        %v192 = vld [vmem:[%s4] sm:$0x1]
        %s193 = sshra.s32 %s190, 7
        %s194 = sand.u32 %s190, 127
        %s195 = sadd.s32 %s193, %s32
        %s196 = smul.u32 %s195, 128
        %s197 = sshra.s32 %s190, 7
        %s198 = sand.u32 %s190, 127
        %s199 = sadd.s32 %s196, %s198
        %s200 = sld [smem:[#allocation5 + %s199]]
        %s201 = scalar_lea.vmem %s1, %s200
        // Predicated region
        $region33: #{bert_embeddings.1} parent=31 // pred_check
          _
        $region34: #{bert_embeddings.1} parent=31 // pred_check_branch
          %203 = sbr.rel target = $region36
        $region35: #{bert_embeddings.1} parent=31 // pred_region
          // Predicated region
          $region48: #{bert_embeddings.1} parent=35 // pred_check
            _
          $region49: #{bert_embeddings.1} parent=35 // pred_check_branch
            %219 = sbr.rel (0) target = $region51
          $region50: #{bert_embeddings.1} parent=35 // pred_region
            %s221 = ssub.s32 2, 1
            loop: start=0, step=1, limit=1
            $region52: #{bert_embeddings.1} parent=50 // loop_pre_header
              _
            $region53: #{bert_embeddings.1} parent=50 // loop_header
              %s223 = sphi 0, %s227
              %p224 = scmp.ge.s32.totalorder %s223, 1
              %s228 = sphi %s201, %s201
              %s229 = sphi [#allocation2], [#allocation2]
            $region54: #{bert_embeddings.1} parent=50 // loop_header_branch
              %226 = sbr.rel (%p224) target = $region58
            $region55: #{bert_embeddings.1} parent=50 // loop_body
              %v230 = vld [vmem:[%s228] sm:%s221]
              %231 = vst [vmem:[%s229] sm:%s221] %v230
            $region56: #{bert_embeddings.1} parent=50 // loop_footer
              %s227 = sadd.s32 1, %s223
            $region57: #{bert_embeddings.1} parent=50 // loop_footer_branch
              %222 = sbr.rel target = $region53
            $region58: #{bert_embeddings.1} parent=50 // loop_exit
              _
          $region51: #{bert_embeddings.1} parent=35 // pred_fallthru
            _
        $region36: #{bert_embeddings.1} parent=31 // pred_fallthru
          _
        // Predicated region
        $region37: #{bert_embeddings.1} parent=31 // pred_check
          _
        $region38: #{bert_embeddings.1} parent=31 // pred_check_branch
          %205 = sbr.rel (0) target = $region40
        $region39: #{bert_embeddings.1} parent=31 // pred_region
          %s207 = ssub.s32 2, 1
          loop: start=0, step=1, limit=1
          $region41: #{bert_embeddings.1} parent=39 // loop_pre_header
            _
          $region42: #{bert_embeddings.1} parent=39 // loop_header
            %s209 = sphi 0, %s213
            %p210 = scmp.ge.s32.totalorder %s209, 1
            %s214 = sphi %s201, %s201
            %s215 = sphi [#allocation2], [#allocation2]
          $region43: #{bert_embeddings.1} parent=39 // loop_header_branch
            %212 = sbr.rel (%p210) target = $region47
          $region44: #{bert_embeddings.1} parent=39 // loop_body
            %v216 = vld [vmem:[%s214] sm:%s207]
            %217 = vst [vmem:[%s215] sm:%s207] %v216
          $region45: #{bert_embeddings.1} parent=39 // loop_footer
            %s213 = sadd.s32 1, %s209
          $region46: #{bert_embeddings.1} parent=39 // loop_footer_branch
            %208 = sbr.rel target = $region42
          $region47: #{bert_embeddings.1} parent=39 // loop_exit
            _
        $region40: #{bert_embeddings.1} parent=31 // pred_fallthru
          _
        // Predicated region
        $region59: #{bert_embeddings.1} parent=31 // pred_check
          _
        $region60: #{bert_embeddings.1} parent=31 // pred_check_branch
          %234 = sbr.rel (0) target = $region62
        $region61: #{bert_embeddings.1} parent=31 // pred_region
          %235 = vsyncadd [#allocation3], 16
        $region62: #{bert_embeddings.1} parent=31 // pred_fallthru
          _
        %s236 = sadd.s32 %s190, 1
        %s237 = sshra.s32 %s236, 7
        %s238 = sand.u32 %s236, 127
        %s239 = sadd.s32 %s237, %s32
        %s240 = smul.u32 %s239, 128
        %s241 = sshra.s32 %s236, 7
        %s242 = sand.u32 %s236, 127
        %s243 = sadd.s32 %s240, %s242
        %s244 = sld [smem:[#allocation5 + %s243]]
        %s245 = scalar_lea.vmem %s1, %s244
        %s246 = scalar_lea.vmem [#allocation2], 1
        // Predicated region
        $region63: #{bert_embeddings.1} parent=31 // pred_check
          _
        $region64: #{bert_embeddings.1} parent=31 // pred_check_branch
          %248 = sbr.rel target = $region66
        $region65: #{bert_embeddings.1} parent=31 // pred_region
          // Predicated region
          $region78: #{bert_embeddings.1} parent=65 // pred_check
            _
          $region79: #{bert_embeddings.1} parent=65 // pred_check_branch
            %264 = sbr.rel (0) target = $region81
          $region80: #{bert_embeddings.1} parent=65 // pred_region
            %s266 = ssub.s32 2, 1
            loop: start=0, step=1, limit=1
            $region82: #{bert_embeddings.1} parent=80 // loop_pre_header
              _
            $region83: #{bert_embeddings.1} parent=80 // loop_header
              %s268 = sphi 0, %s272
              %p269 = scmp.ge.s32.totalorder %s268, 1
              %s273 = sphi %s245, %s245
              %s274 = sphi %s246, %s246
            $region84: #{bert_embeddings.1} parent=80 // loop_header_branch
              %271 = sbr.rel (%p269) target = $region88
            $region85: #{bert_embeddings.1} parent=80 // loop_body
              %v275 = vld [vmem:[%s273] sm:%s266]
              %276 = vst [vmem:[%s274] sm:%s266] %v275
            $region86: #{bert_embeddings.1} parent=80 // loop_footer
              %s272 = sadd.s32 1, %s268
            $region87: #{bert_embeddings.1} parent=80 // loop_footer_branch
              %267 = sbr.rel target = $region83
            $region88: #{bert_embeddings.1} parent=80 // loop_exit
              _
          $region81: #{bert_embeddings.1} parent=65 // pred_fallthru
            _
        $region66: #{bert_embeddings.1} parent=31 // pred_fallthru
          _
        // Predicated region
        $region67: #{bert_embeddings.1} parent=31 // pred_check
          _
        $region68: #{bert_embeddings.1} parent=31 // pred_check_branch
          %250 = sbr.rel (0) target = $region70
        $region69: #{bert_embeddings.1} parent=31 // pred_region
          %s252 = ssub.s32 2, 1
          loop: start=0, step=1, limit=1
          $region71: #{bert_embeddings.1} parent=69 // loop_pre_header
            _
          $region72: #{bert_embeddings.1} parent=69 // loop_header
            %s254 = sphi 0, %s258
            %p255 = scmp.ge.s32.totalorder %s254, 1
            %s259 = sphi %s245, %s245
            %s260 = sphi %s246, %s246
          $region73: #{bert_embeddings.1} parent=69 // loop_header_branch
            %257 = sbr.rel (%p255) target = $region77
          $region74: #{bert_embeddings.1} parent=69 // loop_body
            %v261 = vld [vmem:[%s259] sm:%s252]
            %262 = vst [vmem:[%s260] sm:%s252] %v261
          $region75: #{bert_embeddings.1} parent=69 // loop_footer
            %s258 = sadd.s32 1, %s254
          $region76: #{bert_embeddings.1} parent=69 // loop_footer_branch
            %253 = sbr.rel target = $region72
          $region77: #{bert_embeddings.1} parent=69 // loop_exit
            _
        $region70: #{bert_embeddings.1} parent=31 // pred_fallthru
          _
        // Predicated region
        $region89: #{bert_embeddings.1} parent=31 // pred_check
          _
        $region90: #{bert_embeddings.1} parent=31 // pred_check_branch
          %279 = sbr.rel (0) target = $region92
        $region91: #{bert_embeddings.1} parent=31 // pred_region
          %280 = vsyncadd [#allocation3], 16
        $region92: #{bert_embeddings.1} parent=31 // pred_fallthru
          _
        %s281 = sadd.s32 %s190, 2
        %s282 = sshra.s32 %s281, 7
        %s283 = sand.u32 %s281, 127
        %s284 = sadd.s32 %s282, %s32
        %s285 = smul.u32 %s284, 128
        %s286 = sshra.s32 %s281, 7
        %s287 = sand.u32 %s281, 127
        %s288 = sadd.s32 %s285, %s287
        %s289 = sld [smem:[#allocation5 + %s288]]
        %s290 = scalar_lea.vmem %s1, %s289
        %s291 = scalar_lea.vmem [#allocation2], 2
        // Predicated region
        $region93: #{bert_embeddings.1} parent=31 // pred_check
          _
        $region94: #{bert_embeddings.1} parent=31 // pred_check_branch
          %293 = sbr.rel target = $region96
        $region95: #{bert_embeddings.1} parent=31 // pred_region
          // Predicated region
          $region108: #{bert_embeddings.1} parent=95 // pred_check
            _
          $region109: #{bert_embeddings.1} parent=95 // pred_check_branch
            %309 = sbr.rel (0) target = $region111
          $region110: #{bert_embeddings.1} parent=95 // pred_region
            %s311 = ssub.s32 2, 1
            loop: start=0, step=1, limit=1
            $region112: #{bert_embeddings.1} parent=110 // loop_pre_header
              _
            $region113: #{bert_embeddings.1} parent=110 // loop_header
              %s313 = sphi 0, %s317
              %p314 = scmp.ge.s32.totalorder %s313, 1
              %s318 = sphi %s290, %s290
              %s319 = sphi %s291, %s291
            $region114: #{bert_embeddings.1} parent=110 // loop_header_branch
              %316 = sbr.rel (%p314) target = $region118
            $region115: #{bert_embeddings.1} parent=110 // loop_body
              %v320 = vld [vmem:[%s318] sm:%s311]
              %321 = vst [vmem:[%s319] sm:%s311] %v320
            $region116: #{bert_embeddings.1} parent=110 // loop_footer
              %s317 = sadd.s32 1, %s313
            $region117: #{bert_embeddings.1} parent=110 // loop_footer_branch
              %312 = sbr.rel target = $region113
            $region118: #{bert_embeddings.1} parent=110 // loop_exit
              _
          $region111: #{bert_embeddings.1} parent=95 // pred_fallthru
            _
        $region96: #{bert_embeddings.1} parent=31 // pred_fallthru
          _
        // Predicated region
        $region97: #{bert_embeddings.1} parent=31 // pred_check
          _
        $region98: #{bert_embeddings.1} parent=31 // pred_check_branch
          %295 = sbr.rel (0) target = $region100
        $region99: #{bert_embeddings.1} parent=31 // pred_region
          %s297 = ssub.s32 2, 1
          loop: start=0, step=1, limit=1
          $region101: #{bert_embeddings.1} parent=99 // loop_pre_header
            _
          $region102: #{bert_embeddings.1} parent=99 // loop_header
            %s299 = sphi 0, %s303
            %p300 = scmp.ge.s32.totalorder %s299, 1
            %s304 = sphi %s290, %s290
            %s305 = sphi %s291, %s291
          $region103: #{bert_embeddings.1} parent=99 // loop_header_branch
            %302 = sbr.rel (%p300) target = $region107
          $region104: #{bert_embeddings.1} parent=99 // loop_body
            %v306 = vld [vmem:[%s304] sm:%s297]
            %307 = vst [vmem:[%s305] sm:%s297] %v306
          $region105: #{bert_embeddings.1} parent=99 // loop_footer
            %s303 = sadd.s32 1, %s299
          $region106: #{bert_embeddings.1} parent=99 // loop_footer_branch
            %298 = sbr.rel target = $region102
          $region107: #{bert_embeddings.1} parent=99 // loop_exit
            _
        $region100: #{bert_embeddings.1} parent=31 // pred_fallthru
          _
        // Predicated region
        $region119: #{bert_embeddings.1} parent=31 // pred_check
          _
        $region120: #{bert_embeddings.1} parent=31 // pred_check_branch
          %324 = sbr.rel (0) target = $region122
        $region121: #{bert_embeddings.1} parent=31 // pred_region
          %325 = vsyncadd [#allocation3], 16
        $region122: #{bert_embeddings.1} parent=31 // pred_fallthru
          _
        %s326 = sadd.s32 %s190, 3
        %s327 = sshra.s32 %s326, 7
        %s328 = sand.u32 %s326, 127
        %s329 = sadd.s32 %s327, %s32
        %s330 = smul.u32 %s329, 128
        %s331 = sshra.s32 %s326, 7
        %s332 = sand.u32 %s326, 127
        %s333 = sadd.s32 %s330, %s332
        %s334 = sld [smem:[#allocation5 + %s333]]
        %s335 = scalar_lea.vmem %s1, %s334
        %s336 = scalar_lea.vmem [#allocation2], 3
        // Predicated region
        $region123: #{bert_embeddings.1} parent=31 // pred_check
          _
        $region124: #{bert_embeddings.1} parent=31 // pred_check_branch
          %338 = sbr.rel target = $region126
        $region125: #{bert_embeddings.1} parent=31 // pred_region
          // Predicated region
          $region138: #{bert_embeddings.1} parent=125 // pred_check
            _
          $region139: #{bert_embeddings.1} parent=125 // pred_check_branch
            %354 = sbr.rel (0) target = $region141
          $region140: #{bert_embeddings.1} parent=125 // pred_region
            %s356 = ssub.s32 2, 1
            loop: start=0, step=1, limit=1
            $region142: #{bert_embeddings.1} parent=140 // loop_pre_header
              _
            $region143: #{bert_embeddings.1} parent=140 // loop_header
              %s358 = sphi 0, %s362
              %p359 = scmp.ge.s32.totalorder %s358, 1
              %s363 = sphi %s335, %s335
              %s364 = sphi %s336, %s336
            $region144: #{bert_embeddings.1} parent=140 // loop_header_branch
              %361 = sbr.rel (%p359) target = $region148
            $region145: #{bert_embeddings.1} parent=140 // loop_body
              %v365 = vld [vmem:[%s363] sm:%s356]
              %366 = vst [vmem:[%s364] sm:%s356] %v365
            $region146: #{bert_embeddings.1} parent=140 // loop_footer
              %s362 = sadd.s32 1, %s358
            $region147: #{bert_embeddings.1} parent=140 // loop_footer_branch
              %357 = sbr.rel target = $region143
            $region148: #{bert_embeddings.1} parent=140 // loop_exit
              _
          $region141: #{bert_embeddings.1} parent=125 // pred_fallthru
            _
        $region126: #{bert_embeddings.1} parent=31 // pred_fallthru
          _
        // Predicated region
        $region127: #{bert_embeddings.1} parent=31 // pred_check
          _
        $region128: #{bert_embeddings.1} parent=31 // pred_check_branch
          %340 = sbr.rel (0) target = $region130
        $region129: #{bert_embeddings.1} parent=31 // pred_region
          %s342 = ssub.s32 2, 1
          loop: start=0, step=1, limit=1
          $region131: #{bert_embeddings.1} parent=129 // loop_pre_header
            _
          $region132: #{bert_embeddings.1} parent=129 // loop_header
            %s344 = sphi 0, %s348
            %p345 = scmp.ge.s32.totalorder %s344, 1
            %s349 = sphi %s335, %s335
            %s350 = sphi %s336, %s336
          $region133: #{bert_embeddings.1} parent=129 // loop_header_branch
            %347 = sbr.rel (%p345) target = $region137
          $region134: #{bert_embeddings.1} parent=129 // loop_body
            %v351 = vld [vmem:[%s349] sm:%s342]
            %352 = vst [vmem:[%s350] sm:%s342] %v351
          $region135: #{bert_embeddings.1} parent=129 // loop_footer
            %s348 = sadd.s32 1, %s344
          $region136: #{bert_embeddings.1} parent=129 // loop_footer_branch
            %343 = sbr.rel target = $region132
          $region137: #{bert_embeddings.1} parent=129 // loop_exit
            _
        $region130: #{bert_embeddings.1} parent=31 // pred_fallthru
          _
        // Predicated region
        $region149: #{bert_embeddings.1} parent=31 // pred_check
          _
        $region150: #{bert_embeddings.1} parent=31 // pred_check_branch
          %369 = sbr.rel (0) target = $region152
        $region151: #{bert_embeddings.1} parent=31 // pred_region
          %370 = vsyncadd [#allocation3], 16
        $region152: #{bert_embeddings.1} parent=31 // pred_fallthru
          _
        %s371 = sadd.s32 %s190, 4
        %s372 = sshra.s32 %s371, 7
        %s373 = sand.u32 %s371, 127
        %s374 = sadd.s32 %s372, %s32
        %s375 = smul.u32 %s374, 128
        %s376 = sshra.s32 %s371, 7
        %s377 = sand.u32 %s371, 127
        %s378 = sadd.s32 %s375, %s377
        %s379 = sld [smem:[#allocation5 + %s378]]
        %s380 = scalar_lea.vmem %s1, %s379
        %s381 = scalar_lea.vmem [#allocation2], 4
        // Predicated region
        $region153: #{bert_embeddings.1} parent=31 // pred_check
          _
        $region154: #{bert_embeddings.1} parent=31 // pred_check_branch
          %383 = sbr.rel target = $region156
        $region155: #{bert_embeddings.1} parent=31 // pred_region
          // Predicated region
          $region168: #{bert_embeddings.1} parent=155 // pred_check
            _
          $region169: #{bert_embeddings.1} parent=155 // pred_check_branch
            %399 = sbr.rel (0) target = $region171
          $region170: #{bert_embeddings.1} parent=155 // pred_region
            %s401 = ssub.s32 2, 1
            loop: start=0, step=1, limit=1
            $region172: #{bert_embeddings.1} parent=170 // loop_pre_header
              _
            $region173: #{bert_embeddings.1} parent=170 // loop_header
              %s403 = sphi 0, %s407
              %p404 = scmp.ge.s32.totalorder %s403, 1
              %s408 = sphi %s380, %s380
              %s409 = sphi %s381, %s381
            $region174: #{bert_embeddings.1} parent=170 // loop_header_branch
              %406 = sbr.rel (%p404) target = $region178
            $region175: #{bert_embeddings.1} parent=170 // loop_body
              %v410 = vld [vmem:[%s408] sm:%s401]
              %411 = vst [vmem:[%s409] sm:%s401] %v410
            $region176: #{bert_embeddings.1} parent=170 // loop_footer
              %s407 = sadd.s32 1, %s403
            $region177: #{bert_embeddings.1} parent=170 // loop_footer_branch
              %402 = sbr.rel target = $region173
            $region178: #{bert_embeddings.1} parent=170 // loop_exit
              _
          $region171: #{bert_embeddings.1} parent=155 // pred_fallthru
            _
        $region156: #{bert_embeddings.1} parent=31 // pred_fallthru
          _
        // Predicated region
        $region157: #{bert_embeddings.1} parent=31 // pred_check
          _
        $region158: #{bert_embeddings.1} parent=31 // pred_check_branch
          %385 = sbr.rel (0) target = $region160
        $region159: #{bert_embeddings.1} parent=31 // pred_region
          %s387 = ssub.s32 2, 1
          loop: start=0, step=1, limit=1
          $region161: #{bert_embeddings.1} parent=159 // loop_pre_header
            _
          $region162: #{bert_embeddings.1} parent=159 // loop_header
            %s389 = sphi 0, %s393
            %p390 = scmp.ge.s32.totalorder %s389, 1
            %s394 = sphi %s380, %s380
            %s395 = sphi %s381, %s381
          $region163: #{bert_embeddings.1} parent=159 // loop_header_branch
            %392 = sbr.rel (%p390) target = $region167
          $region164: #{bert_embeddings.1} parent=159 // loop_body
            %v396 = vld [vmem:[%s394] sm:%s387]
            %397 = vst [vmem:[%s395] sm:%s387] %v396
          $region165: #{bert_embeddings.1} parent=159 // loop_footer
            %s393 = sadd.s32 1, %s389
          $region166: #{bert_embeddings.1} parent=159 // loop_footer_branch
            %388 = sbr.rel target = $region162
          $region167: #{bert_embeddings.1} parent=159 // loop_exit
            _
        $region160: #{bert_embeddings.1} parent=31 // pred_fallthru
          _
        // Predicated region
        $region179: #{bert_embeddings.1} parent=31 // pred_check
          _
        $region180: #{bert_embeddings.1} parent=31 // pred_check_branch
          %414 = sbr.rel (0) target = $region182
        $region181: #{bert_embeddings.1} parent=31 // pred_region
          %415 = vsyncadd [#allocation3], 16
        $region182: #{bert_embeddings.1} parent=31 // pred_fallthru
          _
        %s416 = sadd.s32 %s190, 5
        %s417 = sshra.s32 %s416, 7
        %s418 = sand.u32 %s416, 127
        %s419 = sadd.s32 %s417, %s32
        %s420 = smul.u32 %s419, 128
        %s421 = sshra.s32 %s416, 7
        %s422 = sand.u32 %s416, 127
        %s423 = sadd.s32 %s420, %s422
        %s424 = sld [smem:[#allocation5 + %s423]]
        %s425 = scalar_lea.vmem %s1, %s424
        %s426 = scalar_lea.vmem [#allocation2], 5
        // Predicated region
        $region183: #{bert_embeddings.1} parent=31 // pred_check
          _
        $region184: #{bert_embeddings.1} parent=31 // pred_check_branch
          %428 = sbr.rel target = $region186
        $region185: #{bert_embeddings.1} parent=31 // pred_region
          // Predicated region
          $region198: #{bert_embeddings.1} parent=185 // pred_check
            _
          $region199: #{bert_embeddings.1} parent=185 // pred_check_branch
            %444 = sbr.rel (0) target = $region201
          $region200: #{bert_embeddings.1} parent=185 // pred_region
            %s446 = ssub.s32 2, 1
            loop: start=0, step=1, limit=1
            $region202: #{bert_embeddings.1} parent=200 // loop_pre_header
              _
            $region203: #{bert_embeddings.1} parent=200 // loop_header
              %s448 = sphi 0, %s452
              %p449 = scmp.ge.s32.totalorder %s448, 1
              %s453 = sphi %s425, %s425
              %s454 = sphi %s426, %s426
            $region204: #{bert_embeddings.1} parent=200 // loop_header_branch
              %451 = sbr.rel (%p449) target = $region208
            $region205: #{bert_embeddings.1} parent=200 // loop_body
              %v455 = vld [vmem:[%s453] sm:%s446]
              %456 = vst [vmem:[%s454] sm:%s446] %v455
            $region206: #{bert_embeddings.1} parent=200 // loop_footer
              %s452 = sadd.s32 1, %s448
            $region207: #{bert_embeddings.1} parent=200 // loop_footer_branch
              %447 = sbr.rel target = $region203
            $region208: #{bert_embeddings.1} parent=200 // loop_exit
              _
          $region201: #{bert_embeddings.1} parent=185 // pred_fallthru
            _
        $region186: #{bert_embeddings.1} parent=31 // pred_fallthru
          _
        // Predicated region
        $region187: #{bert_embeddings.1} parent=31 // pred_check
          _
        $region188: #{bert_embeddings.1} parent=31 // pred_check_branch
          %430 = sbr.rel (0) target = $region190
        $region189: #{bert_embeddings.1} parent=31 // pred_region
          %s432 = ssub.s32 2, 1
          loop: start=0, step=1, limit=1
          $region191: #{bert_embeddings.1} parent=189 // loop_pre_header
            _
          $region192: #{bert_embeddings.1} parent=189 // loop_header
            %s434 = sphi 0, %s438
            %p435 = scmp.ge.s32.totalorder %s434, 1
            %s439 = sphi %s425, %s425
            %s440 = sphi %s426, %s426
          $region193: #{bert_embeddings.1} parent=189 // loop_header_branch
            %437 = sbr.rel (%p435) target = $region197
          $region194: #{bert_embeddings.1} parent=189 // loop_body
            %v441 = vld [vmem:[%s439] sm:%s432]
            %442 = vst [vmem:[%s440] sm:%s432] %v441
          $region195: #{bert_embeddings.1} parent=189 // loop_footer
            %s438 = sadd.s32 1, %s434
          $region196: #{bert_embeddings.1} parent=189 // loop_footer_branch
            %433 = sbr.rel target = $region192
          $region197: #{bert_embeddings.1} parent=189 // loop_exit
            _
        $region190: #{bert_embeddings.1} parent=31 // pred_fallthru
          _
        // Predicated region
        $region209: #{bert_embeddings.1} parent=31 // pred_check
          _
        $region210: #{bert_embeddings.1} parent=31 // pred_check_branch
          %459 = sbr.rel (0) target = $region212
        $region211: #{bert_embeddings.1} parent=31 // pred_region
          %460 = vsyncadd [#allocation3], 16
        $region212: #{bert_embeddings.1} parent=31 // pred_fallthru
          _
        %s461 = sadd.s32 %s190, 6
        %s462 = sshra.s32 %s461, 7
        %s463 = sand.u32 %s461, 127
        %s464 = sadd.s32 %s462, %s32
        %s465 = smul.u32 %s464, 128
        %s466 = sshra.s32 %s461, 7
        %s467 = sand.u32 %s461, 127
        %s468 = sadd.s32 %s465, %s467
        %s469 = sld [smem:[#allocation5 + %s468]]
        %s470 = scalar_lea.vmem %s1, %s469
        %s471 = scalar_lea.vmem [#allocation2], 6
        // Predicated region
        $region213: #{bert_embeddings.1} parent=31 // pred_check
          _
        $region214: #{bert_embeddings.1} parent=31 // pred_check_branch
          %473 = sbr.rel target = $region216
        $region215: #{bert_embeddings.1} parent=31 // pred_region
          // Predicated region
          $region228: #{bert_embeddings.1} parent=215 // pred_check
            _
          $region229: #{bert_embeddings.1} parent=215 // pred_check_branch
            %489 = sbr.rel (0) target = $region231
          $region230: #{bert_embeddings.1} parent=215 // pred_region
            %s491 = ssub.s32 2, 1
            loop: start=0, step=1, limit=1
            $region232: #{bert_embeddings.1} parent=230 // loop_pre_header
              _
            $region233: #{bert_embeddings.1} parent=230 // loop_header
              %s493 = sphi 0, %s497
              %p494 = scmp.ge.s32.totalorder %s493, 1
              %s498 = sphi %s470, %s470
              %s499 = sphi %s471, %s471
            $region234: #{bert_embeddings.1} parent=230 // loop_header_branch
              %496 = sbr.rel (%p494) target = $region238
            $region235: #{bert_embeddings.1} parent=230 // loop_body
              %v500 = vld [vmem:[%s498] sm:%s491]
              %501 = vst [vmem:[%s499] sm:%s491] %v500
            $region236: #{bert_embeddings.1} parent=230 // loop_footer
              %s497 = sadd.s32 1, %s493
            $region237: #{bert_embeddings.1} parent=230 // loop_footer_branch
              %492 = sbr.rel target = $region233
            $region238: #{bert_embeddings.1} parent=230 // loop_exit
              _
          $region231: #{bert_embeddings.1} parent=215 // pred_fallthru
            _
        $region216: #{bert_embeddings.1} parent=31 // pred_fallthru
          _
        // Predicated region
        $region217: #{bert_embeddings.1} parent=31 // pred_check
          _
        $region218: #{bert_embeddings.1} parent=31 // pred_check_branch
          %475 = sbr.rel (0) target = $region220
        $region219: #{bert_embeddings.1} parent=31 // pred_region
          %s477 = ssub.s32 2, 1
          loop: start=0, step=1, limit=1
          $region221: #{bert_embeddings.1} parent=219 // loop_pre_header
            _
          $region222: #{bert_embeddings.1} parent=219 // loop_header
            %s479 = sphi 0, %s483
            %p480 = scmp.ge.s32.totalorder %s479, 1
            %s484 = sphi %s470, %s470
            %s485 = sphi %s471, %s471
          $region223: #{bert_embeddings.1} parent=219 // loop_header_branch
            %482 = sbr.rel (%p480) target = $region227
          $region224: #{bert_embeddings.1} parent=219 // loop_body
            %v486 = vld [vmem:[%s484] sm:%s477]
            %487 = vst [vmem:[%s485] sm:%s477] %v486
          $region225: #{bert_embeddings.1} parent=219 // loop_footer
            %s483 = sadd.s32 1, %s479
          $region226: #{bert_embeddings.1} parent=219 // loop_footer_branch
            %478 = sbr.rel target = $region222
          $region227: #{bert_embeddings.1} parent=219 // loop_exit
            _
        $region220: #{bert_embeddings.1} parent=31 // pred_fallthru
          _
        // Predicated region
        $region239: #{bert_embeddings.1} parent=31 // pred_check
          _
        $region240: #{bert_embeddings.1} parent=31 // pred_check_branch
          %504 = sbr.rel (0) target = $region242
        $region241: #{bert_embeddings.1} parent=31 // pred_region
          %505 = vsyncadd [#allocation3], 16
        $region242: #{bert_embeddings.1} parent=31 // pred_fallthru
          _
        %s506 = sadd.s32 %s190, 7
        %s507 = sshra.s32 %s506, 7
        %s508 = sand.u32 %s506, 127
        %s509 = sadd.s32 %s507, %s32
        %s510 = smul.u32 %s509, 128
        %s511 = sshra.s32 %s506, 7
        %s512 = sand.u32 %s506, 127
        %s513 = sadd.s32 %s510, %s512
        %s514 = sld [smem:[#allocation5 + %s513]]
        %s515 = scalar_lea.vmem %s1, %s514
        %s516 = scalar_lea.vmem [#allocation2], 7
        // Predicated region
        $region243: #{bert_embeddings.1} parent=31 // pred_check
          _
        $region244: #{bert_embeddings.1} parent=31 // pred_check_branch
          %518 = sbr.rel target = $region246
        $region245: #{bert_embeddings.1} parent=31 // pred_region
          // Predicated region
          $region258: #{bert_embeddings.1} parent=245 // pred_check
            _
          $region259: #{bert_embeddings.1} parent=245 // pred_check_branch
            %534 = sbr.rel (0) target = $region261
          $region260: #{bert_embeddings.1} parent=245 // pred_region
            %s536 = ssub.s32 2, 1
            loop: start=0, step=1, limit=1
            $region262: #{bert_embeddings.1} parent=260 // loop_pre_header
              _
            $region263: #{bert_embeddings.1} parent=260 // loop_header
              %s538 = sphi 0, %s542
              %p539 = scmp.ge.s32.totalorder %s538, 1
              %s543 = sphi %s515, %s515
              %s544 = sphi %s516, %s516
            $region264: #{bert_embeddings.1} parent=260 // loop_header_branch
              %541 = sbr.rel (%p539) target = $region268
            $region265: #{bert_embeddings.1} parent=260 // loop_body
              %v545 = vld [vmem:[%s543] sm:%s536]
              %546 = vst [vmem:[%s544] sm:%s536] %v545
            $region266: #{bert_embeddings.1} parent=260 // loop_footer
              %s542 = sadd.s32 1, %s538
            $region267: #{bert_embeddings.1} parent=260 // loop_footer_branch
              %537 = sbr.rel target = $region263
            $region268: #{bert_embeddings.1} parent=260 // loop_exit
              _
          $region261: #{bert_embeddings.1} parent=245 // pred_fallthru
            _
        $region246: #{bert_embeddings.1} parent=31 // pred_fallthru
          _
        // Predicated region
        $region247: #{bert_embeddings.1} parent=31 // pred_check
          _
        $region248: #{bert_embeddings.1} parent=31 // pred_check_branch
          %520 = sbr.rel (0) target = $region250
        $region249: #{bert_embeddings.1} parent=31 // pred_region
          %s522 = ssub.s32 2, 1
          loop: start=0, step=1, limit=1
          $region251: #{bert_embeddings.1} parent=249 // loop_pre_header
            _
          $region252: #{bert_embeddings.1} parent=249 // loop_header
            %s524 = sphi 0, %s528
            %p525 = scmp.ge.s32.totalorder %s524, 1
            %s529 = sphi %s515, %s515
            %s530 = sphi %s516, %s516
          $region253: #{bert_embeddings.1} parent=249 // loop_header_branch
            %527 = sbr.rel (%p525) target = $region257
          $region254: #{bert_embeddings.1} parent=249 // loop_body
            %v531 = vld [vmem:[%s529] sm:%s522]
            %532 = vst [vmem:[%s530] sm:%s522] %v531
          $region255: #{bert_embeddings.1} parent=249 // loop_footer
            %s528 = sadd.s32 1, %s524
          $region256: #{bert_embeddings.1} parent=249 // loop_footer_branch
            %523 = sbr.rel target = $region252
          $region257: #{bert_embeddings.1} parent=249 // loop_exit
            _
        $region250: #{bert_embeddings.1} parent=31 // pred_fallthru
          _
        // Predicated region
        $region269: #{bert_embeddings.1} parent=31 // pred_check
          _
        $region270: #{bert_embeddings.1} parent=31 // pred_check_branch
          %549 = sbr.rel (0) target = $region272
        $region271: #{bert_embeddings.1} parent=31 // pred_region
          %550 = vsyncadd [#allocation3], 16
        $region272: #{bert_embeddings.1} parent=31 // pred_fallthru
          _
        %s551 = smul.u32 8, 1
        %s552 = sshll.u32 %s551, 4
        %553 = dma.done [#allocation3], %s552
        %v554 = vld [vmem:[#allocation2] sm:$0xff]
        %v555 = vld [vmem:[%s189] sm:$0xff]
        %v556 = vadd.f32 %v554, %v555
        %vm557 = vcmask 261120
        %v558 = vsel %vm557, %v556, 0.0
        %559 = vadd.xlane.f32.xlu0 %v558
        %v560 = vpop.xlane.xlu0 %559
        %v561 = vrcp.pop 32.0
        %v562 = vmul.f32 32.0, %v561
        %v563 = vsub.f32 1.0, %v562
        %v564 = vmul.f32 %v561, %v563
        %v565 = vadd.f32 %v561, %v564
        %vm566 = vweird.f32 %v561
        %v567 = vsel %vm566, %v561, %v565
        %v568 = vmul.f32 %v560, %v567
        %v569 = vsub.f32 %v556, %v568
        %v570 = vmul.f32 %v569, %v569
        %v571 = vsel %vm557, %v570, 0.0
        %572 = vadd.xlane.f32.xlu0 %v571
        %v573 = vpop.xlane.xlu0 %572
        %v574 = vmul.f32 %v573, %v567
        %v575 = vadd.f32 %v574, 1e-12
        %v576 = vrsqrt.pop %v575
        %v577 = vmul.f32 %v576, %v575
        %v578 = vmul.f32 %v577, %v576
        %v579 = vmul.f32 0.5, %v578
        %v580 = vsub.f32 1.5, %v579
        %v581 = vmul.f32 %v576, %v580
        %vm582 = vweird.f32 %v575
        %vm583 = vweird.f32 %v576
        %vm584 = vmor %vm582, %vm583
        %v585 = vsel %vm584, %v576, %v581
        %v587 = vperm.slane %v191, 0
        %v589 = vmul.f32 %v587, %v585
        %v590 = vmul.f32 %v569, %v589
        %v592 = vperm.slane %v192, 0
        %v594 = vadd.f32 %v590, %v592
        %595 = vst.msk [vmem:[%s185] sm:$0xff] %vm557, %v594
        %s596 = sand.u32 %s117, 1
        %s597 = scalar_lea.sflag [#allocation7], %s596
        %s598 = sand.u32 %s117, 1
        %s599 = smul.addr %s598, 8
        %s600 = scalar_lea.vmem [#allocation6], %s599
        // Predicated region
        $region273: #{bert_embeddings.1} parent=31 // pred_check
          %p601 = pneg %p127
        $region274: #{bert_embeddings.1} parent=31 // pred_check_branch
          %603 = sbr.rel (%p601) target = $region276
        $region275: #{bert_embeddings.1} parent=31 // pred_region
          %605 = vsyncadd %s597, 0
          %s606 = sadd.s32 %s31, %s32
          %s607 = smul.addr %s606, 8
          %s608 = scalar_lea.hbm %s5, %s607
          %s610 = sshll.u32 %s600, 4
          %s611 = int_to_ptr.vmem [resolvable:$true] %s610
          %s612 = sshll.u32 %s608, 4
          %s613 = int_to_ptr.hbm [resolvable:$true] %s612
          %615 = dma.vmem_to_hbm [thread:$0]  %s611, 128, %s613, %s597
        $region276: #{bert_embeddings.1} parent=31 // pred_fallthru
          _
      $region32: #{bert_embeddings.1} parent=5 // pred_fallthru
        _
      %p616 = scmp.le.s32.totalorder 2, %s22
      // Predicated region
      $region277: #{bert_embeddings.1} parent=5 // pred_check
        %p617 = pneg %p616
      $region278: #{bert_embeddings.1} parent=5 // pred_check_branch
        %619 = sbr.rel (%p617) target = $region280
      $region279: #{bert_embeddings.1} parent=5 // pred_region
        %s620 = ssub.s32 %s22, 2
        // Predicated region
        $region281: #{bert_embeddings.1} parent=279 // pred_check
          %p621 = pneg %p133
        $region282: #{bert_embeddings.1} parent=279 // pred_check_branch
          %623 = sbr.rel (%p621) target = $region284
        $region283: #{bert_embeddings.1} parent=279 // pred_region
          %s624 = sand.u32 %s118, 1
          %s625 = scalar_lea.sflag [#allocation7], %s624
          %s626 = sand.u32 %s118, 1
          %s627 = smul.addr %s626, 8
          %s628 = scalar_lea.vmem [#allocation6], %s627
          %630 = dma.done %s625, 128
        $region284: #{bert_embeddings.1} parent=279 // pred_fallthru
          _
      $region280: #{bert_embeddings.1} parent=5 // pred_fallthru
        _
    $region6: #{bert_embeddings.1} parent=1 // loop_footer
      %s26 = sadd.s32 1, %s22
    $region7: #{bert_embeddings.1} parent=1 // loop_footer_branch
      %21 = sbr.rel target = $region3
    $region8: #{bert_embeddings.1} parent=1 // loop_exit
      _
    %631 = vsyncpa [#allocation7], 1
    %s632 = scalar_lea.sflag [#allocation7], 1
    %633 = vsyncpa %s632, 1
  %634 = vsyncmov [#allocation3]
  %s635 = vpop.sfrf %634
  %p636 = scmp.eq.s32.totalorder %s635, 0
  %p637 = pneg %p636
  %639 = shalt.err (%p637)

</llo_original>
